<compile_context>
chip_gen: v6e
topology: v6e:2x2x1
jax: 0.10.0
libtpu: 0.0.40
codegen_flags: <defaults>
</compile_context>

<pallas_src>
import functools

import jax
import jax.numpy as jnp
from jax import lax
from jax.experimental import pallas as pl
from jax.experimental.pallas import tpu as pltpu


def _round_up(x, m):
    return ((x + m - 1) // m) * m


def _round_down(x, m):
    return (x // m) * m


def _ce_label_smoothing_kernel(logits_ref, targets_ref, out_ref, *, eps,
                               num_classes, n_rows, row_tile, needs_mask):
    """One grid step: (row_tile, C) logits tile -> per-tile partial loss sum.

    Fused formulation (no log-prob materialization):
        loss_i = lse_i - sum_c w_{i,c} * x_{i,c},   w_{i,c} = eps/C + (1-eps)*[c==t_i]
    """
    x = logits_ref[...].astype(jnp.float32)          # (TM, C)
    t = targets_ref[...]                             # (TM, 1) int32

    # Numerically stable log-sum-exp along the class (lane) axis.
    m = jnp.max(x, axis=-1, keepdims=True)
    lse = jnp.log(jnp.sum(jnp.exp(x - m), axis=-1, keepdims=True)) + m    # (TM, 1)

    # Single weighted reduction over the raw logits (replaces logp / logp_t /
    # sum_logp: removes a full (TM, C) f32 temporary and one XLU reduction).
    col = lax.broadcasted_iota(jnp.int32, x.shape, 1)
    w = jnp.where(col == t, (1.0 - eps) + eps / num_classes, eps / num_classes)
    wx = jnp.sum(w * x, axis=-1, keepdims=True)                           # (TM, 1)

    loss_rows = lse - wx                                                  # (TM, 1)

    if needs_mask:
        # Ragged last tile: rows past the true N contain garbage (no host-side
        # jnp.pad copy of the logits). Use a select, not a multiply, so NaN/Inf
        # in out-of-bounds rows cannot leak into the sum.
        row = (pl.program_id(0) * row_tile
               + lax.broadcasted_iota(jnp.int32, loss_rows.shape, 0))
        loss_rows = jnp.where(row < n_rows, loss_rows, 0.0)

    # Per-tile un-normalized partial sum, broadcast into a lane-dense
    # (8, 128)-aligned block (unmasked store); no carry across grid steps.
    partial = jnp.sum(loss_rows)
    out_ref[...] = jnp.full(out_ref.shape, partial, dtype=jnp.float32)


def bce_loss_soft(prediction, targets, *, eps=0.1, row_tile=None):
    """prediction: [N, C] float logits; targets: [N] int class indices -> scalar f32.

    Equivalent to torch.nn.CrossEntropyLoss(reduction='mean', label_smoothing=eps).
    Targets outside [0, C) contribute only the smoothing term (inputs assumed valid).
    """
    N, C = prediction.shape
    itemsize = jnp.dtype(prediction.dtype).itemsize
    # Sublane packing of the input dtype: f32 -> 8 rows, bf16 -> 16, int8/fp8 -> 32.
    pack = max(8, 32 // itemsize)

    # Generation-aware VMEM budget (v5e/v6e: 128 MiB physical, v7x: 64 MiB per TC).
    try:
        info = pltpu.get_tpu_info()
        vmem_cap = int(getattr(info, "vmem_capacity_bytes", 64 * 1024 * 1024))
    except Exception:  # no TPU info available: assume the smallest (v7x) VMEM
        vmem_cap = 64 * 1024 * 1024
    vmem_limit_bytes = int(min((vmem_cap * 3) // 4, 96 * 1024 * 1024))

    # TODO(synk): for vocab-scale C (>~8K) add a class-dimension grid axis with an
    # online logsumexp instead of requiring the full (row_tile, C) block in VMEM.
    # TODO(synk): for tiny C (< 128) lane occupancy, not HBM, is the ceiling; a
    # production variant could fold 128/C rows into the lane axis.

    if row_tile is None:
        # Per-row working set: double-buffered input tile plus ~4 f32 (TM, C)
        # temporaries in the fused kernel (f32 cast, exp, class iota, w*x).
        bytes_per_row = C * (2 * itemsize + 4 * 4)
        row_tile = (vmem_limit_bytes * 2 // 3) // max(1, bytes_per_row)
        row_tile = max(pack, min(32768, row_tile))

    # Never larger than N rounded up to the packing, always a packing multiple.
    row_tile = min(row_tile, _round_up(N, pack))
    # Keep >= 2 (ideally 4) tiles on the "parallel" axis so v7x's 2 TCs both work.
    if N >= 4 * pack:
        target_tiles = 4
    elif N >= 2 * pack:
        target_tiles = 2
    else:
        target_tiles = 1
    row_tile = min(row_tile, _round_up(-(-N // target_tiles), pack))
    row_tile = max(pack, _round_down(row_tile, pack))

    num_tiles = -(-N // row_tile)
    needs_mask = (N % row_tile) != 0

    t2d = targets.astype(jnp.int32).reshape(N, 1)

    kernel = functools.partial(
        _ce_label_smoothing_kernel, eps=eps, num_classes=C, n_rows=N,
        row_tile=row_tile, needs_mask=needs_mask)

    partials = pl.pallas_call(
        kernel,
        out_shape=jax.ShapeDtypeStruct((num_tiles, 8, 128), jnp.float32),
        grid_spec=pltpu.PrefetchScalarGridSpec(
            num_scalar_prefetch=0,
            grid=(num_tiles,),
            in_specs=[
                pl.BlockSpec((row_tile, C), lambda i: (i, 0)),
                pl.BlockSpec((row_tile, 1), lambda i: (i, 0)),
            ],
            out_specs=pl.BlockSpec((1, 8, 128), lambda i: (i, 0, 0)),
        ),
        compiler_params=pltpu.CompilerParams(
            dimension_semantics=("parallel",),
            vmem_limit_bytes=vmem_limit_bytes,
        ),
    )(prediction, t2d)

    # Per-tile partials reduced in XLA (tree), divide once by the true N.
    return jnp.sum(partials[:, 0, 0]) / jnp.float32(N)


def _reference(prediction, targets, eps=0.1):
    x = prediction.astype(jnp.float32)
    N, C = x.shape
    logp = jax.nn.log_softmax(x, axis=-1)
    onehot = jax.nn.one_hot(targets, C, dtype=jnp.float32)
    q = (1.0 - eps) * onehot + eps / C
    return jnp.mean(-jnp.sum(q * logp, axis=-1))


if __name__ == "__main__":
    key = jax.random.PRNGKey(0)

    # Primary small test: batch=8, classes=32.
    k1, k2, k3, k4 = jax.random.split(key, 4)
    N, C = 8, 32
    prediction = jax.random.normal(k1, (N, C), dtype=jnp.float32)
    targets = jax.random.randint(k2, (N,), 0, C, dtype=jnp.int32)

    loss = bce_loss_soft(prediction, targets)
    loss = jax.block_until_ready(loss)
    ref = _reference(prediction, targets)
    assert jnp.allclose(loss, ref, rtol=1e-5, atol=1e-5), (loss, ref)

    # Also exercise the ragged (un-padded) last-tile path.
    N2, C2 = 13, 32
    prediction2 = jax.random.normal(k3, (N2, C2), dtype=jnp.float32)
    targets2 = jax.random.randint(k4, (N2,), 0, C2, dtype=jnp.int32)
    loss2 = jax.block_until_ready(bce_loss_soft(prediction2, targets2))
    ref2 = _reference(prediction2, targets2)
    assert jnp.allclose(loss2, ref2, rtol=1e-5, atol=1e-5), (loss2, ref2)

    print("KERNEL_OK")
</pallas_src>

<mosaic_0001>
module attributes {stable_mosaic.version = 11 : i64} {
  func.func @_ce_label_smoothing_kernel(%arg0: i32, %arg1: memref<8x32xf32, #tpu.memory_space<vmem>>, %arg2: memref<8x1xi32, #tpu.memory_space<vmem>>, %arg3: memref<1x8x128xf32, #tpu.memory_space<vmem>>) attributes {dimension_semantics = [#tpu.dimension_semantics<parallel>], iteration_bounds = array<i64: 1>, scalar_prefetch = 0 : i64, scratch_operands = 0 : i64, tpu.core_type = #tpu.core_type<tc>, window_params = [{transform_indices = @transform_0, window_bounds = array<i64: 8, 32>}, {transform_indices = @transform_1, window_bounds = array<i64: 8, 1>}, {transform_indices = @transform_2, window_bounds = array<i64: 1, 8, 128>}]} {
    %c0 = arith.constant 0 : index
    %c0_0 = arith.constant 0 : index
    %0 = vector.load %arg1[%c0, %c0_0] : memref<8x32xf32, #tpu.memory_space<vmem>>, vector<8x32xf32>
    %c0_1 = arith.constant 0 : index
    %c0_2 = arith.constant 0 : index
    %1 = vector.load %arg2[%c0_1, %c0_2] : memref<8x1xi32, #tpu.memory_space<vmem>>, vector<8x1xi32>
    %cst = arith.constant dense<0xFF800000> : vector<8xf32>
    %2 = vector.multi_reduction <maximumf>, %0, %cst [1] : vector<8x32xf32> to vector<8xf32>
    %3 = vector.shape_cast %2 : vector<8xf32> to vector<8x1xf32>
    %4 = vector.broadcast %3 : vector<8x1xf32> to vector<8x32xf32>
    %5 = arith.subf %0, %4 : vector<8x32xf32>
    %6 = math.exp %5 : vector<8x32xf32>
    %cst_3 = arith.constant dense<0.000000e+00> : vector<8xf32>
    %7 = vector.multi_reduction <add>, %6, %cst_3 [1] : vector<8x32xf32> to vector<8xf32>
    %8 = vector.shape_cast %7 : vector<8xf32> to vector<8x1xf32>
    %9 = math.log %8 : vector<8x1xf32>
    %10 = arith.addf %9, %3 : vector<8x1xf32>
    %11 = tpu.iota {dimensions = array<i32: 1>} : vector<8x32xi32>
    %12 = vector.broadcast %1 : vector<8x1xi32> to vector<8x32xi32>
    %13 = arith.cmpi eq, %11, %12 : vector<8x32xi32>
    %cst_4 = arith.constant 0.903124988 : f32
    %cst_5 = arith.constant 3.125000e-03 : f32
    %14 = vector.broadcast %cst_4 : f32 to vector<8x32xf32>
    %15 = vector.broadcast %cst_5 : f32 to vector<8x32xf32>
    %16 = arith.select %13, %14, %15 : vector<8x32xi1>, vector<8x32xf32>
    %17 = arith.mulf %16, %0 : vector<8x32xf32>
    %cst_6 = arith.constant dense<0.000000e+00> : vector<8xf32>
    %18 = vector.multi_reduction <add>, %17, %cst_6 [1] : vector<8x32xf32> to vector<8xf32>
    %19 = vector.shape_cast %18 : vector<8xf32> to vector<8x1xf32>
    %20 = arith.subf %10, %19 : vector<8x1xf32>
    %21 = vector.shape_cast %20 : vector<8x1xf32> to vector<1x8x1xf32>
    %cst_7 = arith.constant dense<0.000000e+00> : vector<1xf32>
    %22 = vector.multi_reduction <add>, %21, %cst_7 [1, 2] : vector<1x8x1xf32> to vector<1xf32>
    %23 = vector.shape_cast %22 : vector<1xf32> to vector<1x1x1xf32>
    %24 = vector.extract %23[0, 0, 0] : f32 from vector<1x1x1xf32>
    %25 = vector.broadcast %24 : f32 to vector<1x8x128xf32>
    %c0_8 = arith.constant 0 : index
    %c0_9 = arith.constant 0 : index
    %c0_10 = arith.constant 0 : index
    %26 = vector.load %arg3[%c0_8, %c0_9, %c0_10] : memref<1x8x128xf32, #tpu.memory_space<vmem>>, vector<1x8x128xf32>
    tpu.vector_store %arg3[%c0_8, %c0_9, %c0_10], %25 {strides = array<i32>} : memref<1x8x128xf32, #tpu.memory_space<vmem>>, vector<1x8x128xf32>,
    return
  }
  func.func @transform_0(%arg0: i32) -> (i32, i32) {
    %c0_i32 = arith.constant 0 : i32
    %c0_i32_0 = arith.constant 0 : i32
    return %arg0, %c0_i32 : i32, i32
  }
  func.func @transform_1(%arg0: i32) -> (i32, i32) {
    %c0_i32 = arith.constant 0 : i32
    %c0_i32_0 = arith.constant 0 : i32
    return %arg0, %c0_i32 : i32, i32
  }
  func.func @transform_2(%arg0: i32) -> (i32, i32, i32) {
    %c0_i32 = arith.constant 0 : i32
    %c0_i32_0 = arith.constant 0 : i32
    %c0_i32_1 = arith.constant 0 : i32
    return %arg0, %c0_i32, %c0_i32_0 : i32, i32, i32
  }
}

</mosaic_0001>

<llo_original>
// kernel: tpu_custom_call.1
$region0: #{tpu_custom_call.1}
  #allocation0 [shape = 'u32[]', space=smem, size = 0x4, offset = 0x4, fixed_abs, tag = 'smem constant byte address 0x4 - core index']
  #allocation1 [shape = 'u32[144,128]{1,0:T(1,128)}', space=vmem, size = 0x12000, scoped, tag = 'internal scratch']
  %s0 = inlined_call_operand.vmem [shape: f32[8,32], index: 0, kind: input, shape index: {}]
  %s1 = inlined_call_operand.vmem [shape: s32[8,1], index: 1, kind: input, shape index: {}]
  %s2 = inlined_call_operand.hbm [shape: f32[1,8,128], index: 2, kind: output, shape index: {}]
  %s3 = sld [smem:[#allocation0]]
  $region18: #{tpu_custom_call.1} parent=0
    _
  %s5 = ssub.s32 1, %s3
  %s6 = scalar_select 0, %s5, %s3
  $region1: #{tpu_custom_call.1} parent=0
    #allocation2 [shape = 'u8[4096]{0}', space=vmem, size = 0x1000, scoped, tag = 'output window, operand 0, single buffered']
    #allocation3 [shape = 's32[1]{0}', space=sflag, size = 0x4, scoped, tag = 'scoped memory for tpu_custom_call.1']
    %7 = vsyncpa [#allocation3], 0
    // Predicated region
    $region2: #{tpu_custom_call.1} parent=1 // pred_check
      _
    $region3: #{tpu_custom_call.1} parent=1 // pred_check_branch
      %9 = sbr.rel (0) target = $region5
    $region4: #{tpu_custom_call.1} parent=1 // pred_region
      _
    $region5: #{tpu_custom_call.1} parent=1 // pred_fallthru
      _
    // Predicated region
    $region6: #{tpu_custom_call.1} parent=1 // pred_check
      _
    $region7: #{tpu_custom_call.1} parent=1 // pred_check_branch
      %11 = sbr.rel (0) target = $region9
    $region8: #{tpu_custom_call.1} parent=1 // pred_region
      _
    $region9: #{tpu_custom_call.1} parent=1 // pred_fallthru
      _
    %v12 = vld [vmem:[%s0] sm:$0xff]
    %v13 = vld [vmem:[%s1] sm:$0xff]
    %vm14 = vcmask 261120
    %v15 = vsel %vm14, %v12, -inf
    %16 = vmax.xlane.f32.xlu0 %v15
    %v17 = vpop.xlane.xlu0 %16
    %v18 = vsub.f32 %v12, %v17
    %v19 = vmul.f32 %v18, 1.442695
    %v20 = vpow.pop %v19
    %v21 = vsel %vm14, %v20, 0.0
    %22 = vadd.xlane.f32.xlu0 %v21
    %v23 = vpop.xlane.xlu0 %22
    %v24 = vlog2.pop %v23
    %v25 = vmul.f32 %v24, 0.6931472
    %v26 = vadd.f32 %v25, %v17
    %v27 = vlaneseq
    %v28 = vand.u32 %v27, 127
    %29 = vset.pattern.permute.xlu0 0
    %30 = vperm.xlu0 %29, %v13
    %v31 = vpop.permute.xlu0 %30
    %vm32 = vcmp.eq.s32.totalorder %v28, %v31
    %v33 = vsel %vm32, 0.903125, 0.003125
    %v34 = vmul.f32 %v33, %v12
    %v35 = vsel %vm14, %v34, 0.0
    %36 = vadd.xlane.f32.xlu0 %v35
    %v37 = vpop.xlane.xlu0 %36
    %v38 = vsub.f32 %v26, %v37
    %vm39 = vcmask 7168
    %v40 = vsel %vm39, %v38, 0.0
    %41 = vadd.xlane.f32.xlu0 %v40
    %v42 = vpop.xlane.xlu0 %41
    %v43 = vrot.slane %v42, 4
    %v44 = vadd.f32 %v42, %v43
    %v45 = vrot.slane %v44, 2
    %v46 = vadd.f32 %v44, %v45
    %v47 = vrot.slane %v46, 1
    %v48 = vadd.f32 %v46, %v47
    %s49 = vtos %v48
    %v50 = vstv %s49
    %51 = vst [vmem:[#allocation2] sm:$0xff] %v50
    // Predicated region
    $region10: #{tpu_custom_call.1} parent=1 // pred_check
      _
    $region11: #{tpu_custom_call.1} parent=1 // pred_check_branch
      %53 = sbr.rel (0) target = $region13
    $region12: #{tpu_custom_call.1} parent=1 // pred_region
      %s55 = ssub.s32 128, 128
      %56 = vsyncadd [#allocation3], %s55
      %s58 = sshll.u32 [#allocation2], 4
      %s59 = int_to_ptr.vmem [resolvable:$true] %s58
      %61 = dma.vmem_to_hbm [thread:$0]  %s59, 128, %s2, [#allocation3]
    $region13: #{tpu_custom_call.1} parent=1 // pred_fallthru
      _
    // Predicated region
    $region14: #{tpu_custom_call.1} parent=1 // pred_check
      _
    $region15: #{tpu_custom_call.1} parent=1 // pred_check_branch
      %63 = sbr.rel (0) target = $region17
    $region16: #{tpu_custom_call.1} parent=1 // pred_region
      %64 = dma.done [#allocation3], 128
    $region17: #{tpu_custom_call.1} parent=1 // pred_fallthru
      _
    %65 = vsyncpa [#allocation3], 1

</llo_original>
